<compile_context>
chip_gen: v7x
topology: tpu7x:2x2x1
jax: 0.10.0
libtpu: 0.0.40
codegen_flags: <defaults>
</compile_context>

<pallas_src>
import functools
import math

import numpy as np

import jax
import jax.numpy as jnp
from jax.experimental import pallas as pl
from jax.experimental.pallas import tpu as pltpu

_SQRT2 = math.sqrt(2.0)


def _scaled_lrelu_sin_kernel(x_ref, o_ref, *, negative_slope, hw):
    """x_ref: (Nb, C2b, 2*HW) block;  o_ref: (Nb, 2, C2b, HW) block."""
    x = x_ref[...]
    xe = x[..., :hw]                      # even channels -> leaky relu
    xo = x[..., hw:]                      # odd channels  -> sin
    dt = x.dtype
    scale = jnp.asarray(_SQRT2, dt)
    neg_scale = jnp.asarray(_SQRT2 * negative_slope, dt)
    if 0.0 <= negative_slope <= 1.0:
        # leaky_relu(x)*sqrt2 == max(sqrt2*x, sqrt2*slope*x) for slope in [0,1]
        lr = jnp.maximum(xe * scale, xe * neg_scale)
    else:
        lr = jnp.where(xe >= 0, xe * scale, xe * neg_scale)
    sn = jnp.sin(xo.astype(jnp.float32)) * jnp.float32(_SQRT2)
    o_ref[:, 0, :, :] = lr.astype(o_ref.dtype)
    o_ref[:, 1, :, :] = sn.astype(o_ref.dtype)


def _round_up(a, b):
    return (a + b - 1) // b * b


def _block_vmem_bytes(nb, c2b, hw, dtype):
    """Padded VMEM footprint of one grid step: double-buffered in+out blocks
    plus rough f32 intermediates.  Dtype-aware sublane packing."""
    itemsize = jnp.dtype(dtype).itemsize
    pack = 8 * max(1, 4 // itemsize)          # sublane pad: 8 f32, 16 bf16, 32 int8
    lanes_in = _round_up(2 * hw, 128)
    lanes_half = _round_up(hw, 128)
    rows = _round_up(c2b, pack)
    in_bytes = nb * rows * lanes_in * itemsize
    out_bytes = nb * 2 * rows * lanes_half * itemsize
    # ~3 live f32 half-blocks of intermediates (xo upcast, sin result, lr temp)
    interm = 3 * nb * _round_up(c2b, 8) * lanes_half * 4
    return 2 * (in_bytes + out_bytes) + interm


def scaled_leaky_relu_sin_pallas(x, negative_slope=0.2,
                                 vmem_block_budget_bytes=16 * 1024 * 1024):
    """Forward pass of ScaledLeakyReLUSin for NCHW input with even C."""
    N, C, H, W = x.shape
    assert C % 2 == 0, "ScaledLeakyReLUSin pairs channels; C must be even"
    # TODO(synk): odd C would need a ceil/floor split of the channel axis.
    C2 = C // 2
    HW = H * W
    dtype = x.dtype
    itemsize = jnp.dtype(dtype).itemsize

    # Free contiguous reshape: (N, C, H, W) -> (N, C/2, 2*H*W).  Lanes [0, HW)
    # of each row hold the even channel, lanes [HW, 2*HW) the odd channel.
    xr = x.reshape(N, C2, 2 * HW)

    # ---- block-size selection: largest block under the VMEM budget ----------
    # Channel-half tile: full C/2 (always layout-legal) preferred, otherwise a
    # multiple-of-8 divisor of C/2 (keeps the second-minor dim legal and the
    # grid exact).
    c2_candidates = [C2] + [d for d in range(C2 - (C2 % 8), 0, -8)
                            if d != C2 and C2 % d == 0]
    C2b = c2_candidates[-1]
    for cand in c2_candidates:
        if _block_vmem_bytes(1, cand, HW, dtype) <= vmem_block_budget_bytes:
            C2b = cand
            break
    # TODO(synk): for huge H*W with an untileable C/2 the block may exceed the
    # budget; an HW-axis tile would be needed there.

    # Batch samples per grid step (divisors of N only -> exact grid).
    Nb = 1
    if C2b == C2:
        for nb in range(N, 0, -1):
            if N % nb == 0 and _block_vmem_bytes(nb, C2b, HW, dtype) <= vmem_block_budget_bytes:
                Nb = nb
                break

    # Keep >= 2 grid steps when possible so a 2-TensorCore chip (v7x) can split
    # the "parallel" axes; split N first, then C/2.
    def _num_steps():
        return (N // Nb) * (C2 // C2b)

    if _num_steps() < 2 and N > 1:
        for nb in range(N // 2, 0, -1):
            if N % nb == 0:
                Nb = nb
                break
    if _num_steps() < 2:
        for cand in c2_candidates:
            if cand < C2:
                C2b = cand
                break
    # TODO(synk): use pltpu.CORE_PARALLEL on the leading axis for an explicit,
    # balanced 2-TC split on v7x (kept "parallel" here for portability).

    grid = (N // Nb, C2 // C2b)

    total = N * C * HW
    cost = pl.CostEstimate(
        flops=3 * total,                  # 2 mul + 1 max (even half), scale (odd half)
        transcendentals=N * C2 * HW,      # sin on the odd half only
        bytes_accessed=2 * total * itemsize,
    )

    out_r = pl.pallas_call(
        functools.partial(_scaled_lrelu_sin_kernel,
                          negative_slope=float(negative_slope), hw=HW),
        out_shape=jax.ShapeDtypeStruct((N, 2, C2, HW), dtype),
        grid_spec=pltpu.PrefetchScalarGridSpec(
            num_scalar_prefetch=0,
            grid=grid,
            in_specs=[pl.BlockSpec((Nb, C2b, 2 * HW), lambda n, c: (n, c, 0))],
            out_specs=pl.BlockSpec((Nb, 2, C2b, HW), lambda n, c: (n, 0, c, 0)),
        ),
        compiler_params=pltpu.CompilerParams(
            dimension_semantics=("parallel", "parallel"),
            vmem_limit_bytes=48 * 1024 * 1024,   # within the v7x 64 MiB/TC cap
        ),
        cost_estimate=cost,
    )(xr)

    # Free reshape back to NCHW: channels [0, C/2) = leaky-relu half,
    # channels [C/2, C) = sin half  (== torch.cat([out_lr, out_sin], dim=1)).
    return out_r.reshape(N, C, H, W)


def _reference(x, negative_slope=0.2):
    """Pure-JAX reference matching the PyTorch module."""
    xe = x[:, ::2]
    xo = x[:, 1::2]
    out_lr = jnp.where(xe >= 0, xe, negative_slope * xe)
    out_sin = jnp.sin(xo)
    return jnp.concatenate([out_lr, out_sin], axis=1) * np.float32(_SQRT2)


if __name__ == "__main__":
    key = jax.random.PRNGKey(0)
    N, C, H, W = 2, 4, 16, 16
    x = jax.random.normal(key, (N, C, H, W), dtype=jnp.float32)

    out = jax.block_until_ready(scaled_leaky_relu_sin_pallas(x, negative_slope=0.2))
    ref = jax.block_until_ready(_reference(x, negative_slope=0.2))

    np.testing.assert_allclose(np.asarray(out), np.asarray(ref), rtol=1e-5, atol=1e-5)
    print("KERNEL_OK")
</pallas_src>

<mosaic_0001>
module attributes {stable_mosaic.version = 11 : i64} {
  func.func @_scaled_lrelu_sin_kernel(%arg0: i32, %arg1: i32, %arg2: memref<1x2x512xf32, #tpu.memory_space<vmem>>, %arg3: memref<1x2x2x256xf32, #tpu.memory_space<vmem>>) attributes {dimension_semantics = [#tpu.dimension_semantics<parallel>, #tpu.dimension_semantics<parallel>], iteration_bounds = array<i64: 2, 1>, scalar_prefetch = 0 : i64, scratch_operands = 0 : i64, tpu.core_type = #tpu.core_type<tc>, window_params = [{transform_indices = @transform_0, window_bounds = array<i64: 1, 2, 512>}, {transform_indices = @transform_1, window_bounds = array<i64: 1, 2, 2, 256>}]} {
    %c0 = arith.constant 0 : index
    %c0_0 = arith.constant 0 : index
    %c0_1 = arith.constant 0 : index
    %0 = vector.load %arg2[%c0, %c0_0, %c0_1] : memref<1x2x512xf32, #tpu.memory_space<vmem>>, vector<1x2x512xf32>
    %1 = vector.extract_strided_slice %0 {offsets = [0, 0, 0], sizes = [1, 2, 256], strides = [1, 1, 1]} : vector<1x2x512xf32> to vector<1x2x256xf32>
    %2 = vector.extract_strided_slice %0 {offsets = [0, 0, 256], sizes = [1, 2, 256], strides = [1, 1, 1]} : vector<1x2x512xf32> to vector<1x2x256xf32>
    %cst = arith.constant 1.41421354 : f32
    %3 = vector.broadcast %cst : f32 to vector<1x2x256xf32>
    %4 = arith.mulf %1, %3 : vector<1x2x256xf32>
    %cst_2 = arith.constant 0.282842726 : f32
    %5 = vector.broadcast %cst_2 : f32 to vector<1x2x256xf32>
    %6 = arith.mulf %1, %5 : vector<1x2x256xf32>
    %7 = arith.maximumf %4, %6 : vector<1x2x256xf32>
    %8 = math.sin %2 : vector<1x2x256xf32>
    %cst_3 = arith.constant 1.41421354 : f32
    %9 = vector.broadcast %cst_3 : f32 to vector<1x2x256xf32>
    %10 = arith.mulf %8, %9 : vector<1x2x256xf32>
    %c0_4 = arith.constant 0 : index
    %c0_5 = arith.constant 0 : index
    %c0_6 = arith.constant 0 : index
    %c0_7 = arith.constant 0 : index
    %11 = vector.load %arg3[%c0_4, %c0_5, %c0_6, %c0_7] : memref<1x2x2x256xf32, #tpu.memory_space<vmem>>, vector<1x1x2x256xf32>
    %12 = vector.shape_cast %11 : vector<1x1x2x256xf32> to vector<1x2x256xf32>
    %13 = vector.shape_cast %7 : vector<1x2x256xf32> to vector<1x1x2x256xf32>
    tpu.vector_store %arg3[%c0_4, %c0_5, %c0_6, %c0_7], %13 {strides = array<i32>} : memref<1x2x2x256xf32, #tpu.memory_space<vmem>>, vector<1x1x2x256xf32>,
    %c0_8 = arith.constant 0 : index
    %c1 = arith.constant 1 : index
    %c0_9 = arith.constant 0 : index
    %c0_10 = arith.constant 0 : index
    %14 = vector.load %arg3[%c0_8, %c1, %c0_9, %c0_10] : memref<1x2x2x256xf32, #tpu.memory_space<vmem>>, vector<1x1x2x256xf32>
    %15 = vector.shape_cast %14 : vector<1x1x2x256xf32> to vector<1x2x256xf32>
    %16 = vector.shape_cast %10 : vector<1x2x256xf32> to vector<1x1x2x256xf32>
    tpu.vector_store %arg3[%c0_8, %c1, %c0_9, %c0_10], %16 {strides = array<i32>} : memref<1x2x2x256xf32, #tpu.memory_space<vmem>>, vector<1x1x2x256xf32>,
    return
  }
  func.func @transform_0(%arg0: i32, %arg1: i32) -> (i32, i32, i32) {
    %c0_i32 = arith.constant 0 : i32
    %c0_i32_0 = arith.constant 0 : i32
    return %arg0, %arg1, %c0_i32 : i32, i32, i32
  }
  func.func @transform_1(%arg0: i32, %arg1: i32) -> (i32, i32, i32, i32) {
    %c0_i32 = arith.constant 0 : i32
    %c0_i32_0 = arith.constant 0 : i32
    %c0_i32_1 = arith.constant 0 : i32
    return %arg0, %c0_i32, %arg1, %c0_i32_0 : i32, i32, i32, i32
  }
}

</mosaic_0001>

<llo_original>
// kernel: tpu_custom_call.1
$region0: #{tpu_custom_call.1}
  #allocation0 [shape = 'u32[]', space=smem, size = 0x4, offset = 0x4, fixed_abs, tag = 'smem constant byte address 0x4 - core index']
  #allocation1 [shape = 'u32[144,128]{1,0:T(1,128)}', space=vmem, size = 0x12000, scoped, tag = 'internal scratch']
  %s0 = inlined_call_operand.hbm [shape: f32[2,2,512], index: 0, kind: input, shape index: {}]
  %s1 = inlined_call_operand.hbm [shape: f32[2,2,2,256], index: 1, kind: output, shape index: {}]
  %s2 = sld [smem:[#allocation0]]
  $region41: #{tpu_custom_call.1} parent=0
    _
  %s4 = ssub.s32 1, %s2
  %s5 = scalar_select 0, %s4, %s2
  $region1: #{tpu_custom_call.1} parent=0
    #allocation2 [shape = 'u8[8192]{0}', space=vmem, size = 0x2000, scoped, tag = 'input window, operand 0']
    #allocation3 [shape = 's32[2]{0}', space=sflag, size = 0x8, scoped, tag = 'scoped memory for tpu_custom_call.1']
    #allocation4 [shape = 's32[2]{0}', space=sflag, size = 0x8, scoped, tag = 'scoped memory for tpu_custom_call.1']
    #allocation5 [shape = 'u8[8192]{0}', space=vmem, size = 0x2000, scoped, tag = 'output window, operand 0']
    %6 = vsyncpa [#allocation3], 0
    %s7 = scalar_lea.sflag [#allocation3], 1
    %8 = vsyncpa %s7, 0
    %9 = vsyncpa [#allocation4], 0
    %s10 = scalar_lea.sflag [#allocation4], 1
    %11 = vsyncpa %s10, 0
    loop: start=0, step=1, limit=4
    $region2: #{tpu_custom_call.1} parent=1 // loop_pre_header
      _
    $region3: #{tpu_custom_call.1} parent=1 // loop_header
      %s13 = sphi 0, %s17
      %p14 = scmp.ge.s32.totalorder %s13, 4
      %s20 = sphi 0, %s32
      %s21 = sphi 0, %s28
      %s22 = sphi 0, %s20
      %s23 = sphi 0, %s21
      %s24 = sphi 0, %s22
      %s25 = sphi 0, %s23
      %s37 = sphi 0, %s39
      %s40 = sphi 0, %s37
      %s41 = sphi 0, %s40
      %s57 = sphi 0, %s41
      %s65 = sphi 0, %s67
      %s68 = sphi 0, %s65
      %s69 = sphi 0, %s68
      %s85 = sphi 0, %s69
    $region4: #{tpu_custom_call.1} parent=1 // loop_header_branch
      %16 = sbr.rel (%p14) target = $region8
    $region5: #{tpu_custom_call.1} parent=1 // loop_body
      %s18 = ssub.s32 %s13, 1
      %s19 = ssub.s32 %s13, 2
      %s26 = sadd.s32 1, %s21
      %p27 = scmp.ge.s32.totalorder %s26, 1
      %s28 = scalar_select %p27, 0, %s26
      %s29 = sadd.s32 1, %s20
      %s30 = scalar_select %p27, %s29, %s20
      %p31 = scmp.ge.s32.totalorder %s30, 2
      %s32 = scalar_select %p31, 0, %s30
      %s33 = ssub.s32 %s20, %s32
      %s34 = ssub.s32 %s21, %s28
      %s35 = sor.u32 %s33, %s34
      %p36 = scmp.eq.s32.totalorder %s35, 0
      %s38 = sadd.s32 %s37, 1
      %s39 = scalar_select %p36, %s37, %s38
      %p42 = pneg %p36
      %p43 = scmp.eq.s32.totalorder %s13, 1
      %p44 = por %p42, %p43
      %p45 = scmp.ne.s32.totalorder %s37, %s40
      %p46 = scmp.eq.s32.totalorder %s13, 0
      %p47 = por %p45, %p46
      %p48 = scmp.ne.s32.totalorder %s37, %s40
      %p49 = scmp.eq.s32.totalorder %s18, 1
      %p50 = por %p48, %p49
      %p51 = scmp.ne.s32.totalorder %s40, %s41
      %p52 = scmp.eq.s32.totalorder %s18, 0
      %p53 = por %p51, %p52
      %p54 = scmp.ne.s32.totalorder %s40, %s41
      %p55 = scmp.eq.s32.totalorder %s19, 1
      %p56 = por %p54, %p55
      %p58 = scmp.ne.s32.totalorder %s41, %s57
      %p59 = scmp.eq.s32.totalorder %s19, 0
      %p60 = por %p58, %p59
      %s61 = ssub.s32 %s20, %s32
      %s62 = ssub.s32 %s21, %s28
      %s63 = sor.u32 %s61, %s62
      %p64 = scmp.eq.s32.totalorder %s63, 0
      %s66 = sadd.s32 %s65, 1
      %s67 = scalar_select %p64, %s65, %s66
      %p70 = pneg %p64
      %p71 = scmp.eq.s32.totalorder %s13, 1
      %p72 = por %p70, %p71
      %p73 = scmp.ne.s32.totalorder %s65, %s68
      %p74 = scmp.eq.s32.totalorder %s13, 0
      %p75 = por %p73, %p74
      %p76 = scmp.ne.s32.totalorder %s65, %s68
      %p77 = scmp.eq.s32.totalorder %s18, 1
      %p78 = por %p76, %p77
      %p79 = scmp.ne.s32.totalorder %s68, %s69
      %p80 = scmp.eq.s32.totalorder %s18, 0
      %p81 = por %p79, %p80
      %p82 = scmp.ne.s32.totalorder %s68, %s69
      %p83 = scmp.eq.s32.totalorder %s19, 1
      %p84 = por %p82, %p83
      %p86 = scmp.ne.s32.totalorder %s69, %s85
      %p87 = scmp.eq.s32.totalorder %s19, 0
      %p88 = por %p86, %p87
      %p89 = scmp.le.s32.totalorder 1, %s13
      %p90 = scmp.lt.s32.totalorder %s13, 3
      %p91 = pnand %p89, %p90
      %p92 = pneg %p91
      // Predicated region
      $region9: #{tpu_custom_call.1} parent=5 // pred_check
        _
      $region10: #{tpu_custom_call.1} parent=5 // pred_check_branch
        %94 = sbr.rel (%p91) target = $region12
      $region11: #{tpu_custom_call.1} parent=5 // pred_region
        %s95 = ssub.s32 %s13, 1
      $region12: #{tpu_custom_call.1} parent=5 // pred_fallthru
        _
      %p96 = scmp.lt.s32.totalorder %s13, 2
      // Predicated region
      $region13: #{tpu_custom_call.1} parent=5 // pred_check
        %p97 = pneg %p96
      $region14: #{tpu_custom_call.1} parent=5 // pred_check_branch
        %99 = sbr.rel (%p97) target = $region16
      $region15: #{tpu_custom_call.1} parent=5 // pred_region
        // Predicated region
        $region17: #{tpu_custom_call.1} parent=15 // pred_check
          %p100 = pneg %p47
        $region18: #{tpu_custom_call.1} parent=15 // pred_check_branch
          %102 = sbr.rel (%p100) target = $region20
        $region19: #{tpu_custom_call.1} parent=15 // pred_region
          %s103 = sand.u32 %s37, 1
          %s104 = scalar_lea.sflag [#allocation3], %s103
          %s105 = sand.u32 %s37, 1
          %s106 = smul.addr %s105, 8
          %s107 = scalar_lea.vmem [#allocation2], %s106
          %s109 = ssub.s32 128, 128
          %110 = vsyncadd %s104, %s109
          %s111 = smul.addr %s21, 4
          %s112 = smul.addr %s20, 4
          %s113 = sadd.s32 %s111, %s112
          %s114 = smul.addr %s113, 32
          %s115 = scalar_lea.hbm %s0, %s114
          %s117 = sshll.u32 %s107, 4
          %s118 = int_to_ptr.vmem [resolvable:$true] %s117
          %120 = dma.hbm_to_vmem [thread:$0]  %s115, 128, %s118, %s104
        $region20: #{tpu_custom_call.1} parent=15 // pred_fallthru
          _
      $region16: #{tpu_custom_call.1} parent=5 // pred_fallthru
        _
      %p121 = scmp.le.s32.totalorder 1, %s13
      %p122 = scmp.lt.s32.totalorder %s13, 3
      %p123 = pnand %p121, %p122
      %p124 = pneg %p123
      // Predicated region
      $region21: #{tpu_custom_call.1} parent=5 // pred_check
        _
      $region22: #{tpu_custom_call.1} parent=5 // pred_check_branch
        %126 = sbr.rel (%p123) target = $region24
      $region23: #{tpu_custom_call.1} parent=5 // pred_region
        %s127 = ssub.s32 %s13, 1
        %s128 = sand.u32 %s40, 1
        %s129 = scalar_lea.sflag [#allocation3], %s128
        %s130 = sand.u32 %s40, 1
        %s131 = smul.addr %s130, 8
        %s132 = scalar_lea.vmem [#allocation2], %s131
        // Predicated region
        $region25: #{tpu_custom_call.1} parent=23 // pred_check
          %p133 = pneg %p53
        $region26: #{tpu_custom_call.1} parent=23 // pred_check_branch
          %135 = sbr.rel (%p133) target = $region28
        $region27: #{tpu_custom_call.1} parent=23 // pred_region
          %136 = dma.done %s129, 128
        $region28: #{tpu_custom_call.1} parent=23 // pred_fallthru
          _
        %s137 = sand.u32 %s40, 1
        %s138 = scalar_lea.sflag [#allocation3], %s137
        %s139 = sand.u32 %s40, 1
        %s140 = smul.addr %s139, 8
        %s141 = scalar_lea.vmem [#allocation2], %s140
        %p142 = pneg %p53
        %p143 = pneg %p50
        %p144 = pneg %p81
        %p145 = pneg %p78
        %s146 = sand.u32 %s68, 1
        %s147 = scalar_lea.sflag [#allocation4], %s146
        %s148 = sand.u32 %s68, 1
        %s149 = smul.addr %s148, 8
        %s150 = scalar_lea.vmem [#allocation5], %s149
        %v151 = vld [vmem:[%s132] sm:$0xff]
        %v152 = vmul.f32 %v151, 1.4142135
        %v153 = vmul.f32 %v151, 0.28284273
        %v154 = vmax.f32 %v152, %v153
        %v156 = vrot.slane %v151, 4
        %v158 = vand.u32 2147483647, %v156
        %vm159 = vcmp.le.f32.partialorder %v158, 0.7853982
        %vm160 = vcmp.lt.s32.totalorder %v156, 0
        %v161 = vand.u32 %v156, 2139095040
        %v162 = vshrl.u32 %v161, 23
        %v163 = vsub.s32 %v162, 127
        %v164 = vand.u32 2147483647, %v156
        %v165 = vand.u32 %v164, 8388607
        %v166 = vor.u32 %v165, 8388608
        %v167 = vsub.s32 0, %v166
        %v168 = vadd.s32 %v163, 1
        %vm169 = vcmp.gt.s32.totalorder %v168, 0
        %v170 = vsel %vm169, %v168, 0
        %v171 = vshrl.u32 %v170, 5
        %v172 = vand.u32 %v170, 31
        %v173 = vsub.s32 32, %v172
        %v174 = vshrl.u32 683565275, %v173
        %v175 = vshll.u32 683565275, %v172
        %v176 = vshrl.u32 2475754826, %v173
        %v177 = vor.u32 %v175, %v176
        %v178 = vshll.u32 2475754826, %v172
        %v179 = vshrl.u32 2131351028, %v173
        %v180 = vor.u32 %v178, %v179
        %v181 = vshll.u32 2131351028, %v172
        %v182 = vshrl.u32 2102212464, %v173
        %v183 = vor.u32 %v181, %v182
        %v184 = vshll.u32 2102212464, %v172
        %v185 = vshrl.u32 920167782, %v173
        %v186 = vor.u32 %v184, %v185
        %v187 = vshll.u32 920167782, %v172
        %v188 = vshrl.u32 1326507024, %v173
        %v189 = vor.u32 %v187, %v188
        %vm190 = vcmp.lt.s32.totalorder %v171, 1
        %vm191 = vcmp.lt.s32.totalorder %v171, 2
        %vm192 = vcmp.lt.s32.totalorder %v171, 3
        %vm193 = vcmp.lt.s32.totalorder %v171, 4
        %v194 = vsel %vm190, %v174, %v177
        %v195 = vsel %vm193, %v183, 2102212464
        %v196 = vsel %vm192, %v180, %v195
        %v197 = vsel %vm191, %v194, %v196
        %v198 = vsel %vm190, %v177, %v180
        %v199 = vsel %vm193, %v186, 920167782
        %v200 = vsel %vm192, %v183, %v199
        %v201 = vsel %vm191, %v198, %v200
        %v202 = vsel %vm190, %v180, %v183
        %v203 = vsel %vm193, %v189, 1326507024
        %v204 = vsel %vm192, %v186, %v203
        %v205 = vsel %vm191, %v202, %v204
        %v206 = vshll.u32 %v166, 8
        %v207 = vmul.u32.u64.compose %v206, %v205
        %v208 = vextract.low.u32 %v207
        %v209 = vextract.high.u32 %v207
        %v210 = vmul.u32.u64.compose %v206, %v201
        %v211 = vextract.low.u32 %v210
        %v212 = vextract.high.u32 %v210
        %v213 = vmul.u32 %v206, %v197
        %v214 = vadd.s32 %v209, %v211
        %vm215 = vc.u32 %v209, %v211
        %v216 = vadd.s32 %v212, 1
        %v217 = vsel %vm215, %v216, %v212
        %v218 = vadd.s32 %v213, %v217
        %v219 = vadd.s32 %v218, 536870912
        %v220 = vshrl.u32 %v219, 30
        %v221 = vshll.u32 %v220, 30
        %v222 = vsub.s32 %v218, %v221
        %vm223 = vcmp.lt.s32.totalorder %v222, 0
        %v224 = vsub.s32 0, %v222
        %v225 = vsel %vm223, %v224, %v222
        %v226 = vclz %v225
        %v227 = vsub.s32 %v226, 2
        %vm228 = vcmp.gt.s32.totalorder 0, %v227
        %v229 = vsel %vm228, 0, %v227
        %v230 = vsub.s32 32, %v229
        %v231 = vshll.u32 %v222, %v229
        %v232 = vshrl.u32 %v214, %v230
        %v233 = vor.u32 %v231, %v232
        %v234 = vsub.s32 4294967266, %v229
        %v235 = vadd.s32 %v234, 127
        %v236 = vshll.u32 %v235, 23
        %v237 = vor.u32 4788187, %v236
        %v238 = vand.u32 2147483647, %v237
        %v240 = vcvt.s32.f32 %v233
        %v241 = vmul.f32 %v240, %v238
        %v242 = vxor.u32 %v241, 2147483648
        %v243 = vsel %vm160, %v242, %v241
        %v244 = vsub.s32 4, %v220
        %v245 = vsel %vm160, %v244, %v220
        %v246 = vsel %vm159, %v156, %v243
        %v247 = vsel %vm159, 0, %v245
        %v248 = vcosq.f32.pop %v246
        %v249 = vsinq.f32.pop %v246
        %vm250 = vweird.f32 %v156
        %v251 = vadd.s32 %v247, 3
        %v252 = vand.u32 %v251, 3
        %vm253 = vcmp.lt.s32.totalorder %v252, 2
        %vm254 = vcmp.eq.s32.totalorder %v252, 0
        %v255 = vxor.u32 %v249, 2147483648
        %v256 = vsel %vm254, %v248, %v255
        %vm257 = vcmp.eq.s32.totalorder %v252, 2
        %v258 = vxor.u32 %v248, 2147483648
        %v259 = vsel %vm257, %v258, %v249
        %v260 = vsel %vm253, %v256, %v259
        %v261 = vsel %vm250, nan, %v260
        %v262 = vmul.f32 %v261, 1.4142135
        %263 = vst [vmem:[%s150] sm:$0xf] %v154
        %s264 = scalar_lea.vmem %s150, 4 [#allocation5]
        %265 = vst [vmem:[%s264] sm:$0xf] %v262
        %s266 = sand.u32 %s68, 1
        %s267 = scalar_lea.sflag [#allocation4], %s266
        %s268 = sand.u32 %s68, 1
        %s269 = smul.addr %s268, 8
        %s270 = scalar_lea.vmem [#allocation5], %s269
        // Predicated region
        $region29: #{tpu_custom_call.1} parent=23 // pred_check
          %p271 = pneg %p78
        $region30: #{tpu_custom_call.1} parent=23 // pred_check_branch
          %273 = sbr.rel (%p271) target = $region32
        $region31: #{tpu_custom_call.1} parent=23 // pred_region
          %s275 = ssub.s32 128, 128
          %276 = vsyncadd %s267, %s275
          %s277 = smul.addr %s23, 2
          %s278 = smul.addr %s22, 4
          %s279 = sadd.s32 %s277, %s278
          %s280 = smul.addr %s279, 32
          %s281 = scalar_lea.hbm %s1, %s280
          %s282 = sshll.u32 %s270, 4
          %s283 = int_to_ptr.vmem [resolvable:$true] %s282
          %288 = dma.vmem_to_hbm [thread:$0]  %s283, 128, %s281, %s267, 64, 64, 4
        $region32: #{tpu_custom_call.1} parent=23 // pred_fallthru
          _
      $region24: #{tpu_custom_call.1} parent=5 // pred_fallthru
        _
      %p289 = scmp.le.s32.totalorder 2, %s13
      // Predicated region
      $region33: #{tpu_custom_call.1} parent=5 // pred_check
        %p290 = pneg %p289
      $region34: #{tpu_custom_call.1} parent=5 // pred_check_branch
        %292 = sbr.rel (%p290) target = $region36
      $region35: #{tpu_custom_call.1} parent=5 // pred_region
        %s293 = ssub.s32 %s13, 2
        // Predicated region
        $region37: #{tpu_custom_call.1} parent=35 // pred_check
          %p294 = pneg %p84
        $region38: #{tpu_custom_call.1} parent=35 // pred_check_branch
          %296 = sbr.rel (%p294) target = $region40
        $region39: #{tpu_custom_call.1} parent=35 // pred_region
          %s297 = sand.u32 %s69, 1
          %s298 = scalar_lea.sflag [#allocation4], %s297
          %s299 = sand.u32 %s69, 1
          %s300 = smul.addr %s299, 8
          %s301 = scalar_lea.vmem [#allocation5], %s300
          %302 = dma.done %s298, 128
        $region40: #{tpu_custom_call.1} parent=35 // pred_fallthru
          _
      $region36: #{tpu_custom_call.1} parent=5 // pred_fallthru
        _
    $region6: #{tpu_custom_call.1} parent=1 // loop_footer
      %s17 = sadd.s32 1, %s13
    $region7: #{tpu_custom_call.1} parent=1 // loop_footer_branch
      %12 = sbr.rel target = $region3
    $region8: #{tpu_custom_call.1} parent=1 // loop_exit
      _
    %303 = vsyncpa [#allocation3], 1
    %s304 = scalar_lea.sflag [#allocation3], 1
    %305 = vsyncpa %s304, 1
    %306 = vsyncpa [#allocation4], 1
    %s307 = scalar_lea.sflag [#allocation4], 1
    %308 = vsyncpa %s307, 1

</llo_original>
